<compile_context>
chip_gen: v6e
topology: v6e:2x2x1
jax: 0.10.0
libtpu: 0.0.40
codegen_flags: <defaults>
</compile_context>

<pallas_src>
import jax
import jax.numpy as jnp
from jax import lax
from jax.experimental import pallas as pl
from jax.experimental.pallas import tpu as pltpu


def rnn_kernel(x_ref, h0_ref, wih_t_ref, whh_t_ref, bias_ref, wout_t_ref, bout_ref,
               out_ref, hs_ref, pre_ref, hseq_ref):
    """Whole-sequence RNN forward, all operands resident in VMEM.

    x_ref:      (S, B, I)   time-major input
    h0_ref:     (B, H)      initial hidden state
    wih_t_ref:  (I, H)      W_ih^T (pre-transposed in wrapper)
    whh_t_ref:  (H, H)      W_hh^T
    bias_ref:   (1, H)      b_ih + b_hh (fused in wrapper)
    wout_t_ref: (H, O)      W_out^T
    bout_ref:   (1, O)      b_out
    out_ref:    (S, B, O)   time-major output (wrapper transposes back)
    hs_ref:     (B, H)      final hidden state
    pre_ref:    (S, B, H)   VMEM scratch: hoisted input projection
    hseq_ref:   (S, B, H)   VMEM scratch: per-step hidden states
    """
    S, B, I = x_ref.shape
    H = whh_t_ref.shape[0]
    O = wout_t_ref.shape[1]

    # --- 1) Input projection + fused bias, hoisted out of the recurrence. ---
    x_flat = x_ref[...].reshape(S * B, I)
    pre_flat = (jnp.dot(x_flat, wih_t_ref[...], preferred_element_type=jnp.float32)
                + bias_ref[...])
    pre_ref[...] = pre_flat.reshape(S, B, H)

    whh_t = whh_t_ref[...]

    # --- 2) Serial recurrence: one small matmul + tanh per step, fully unrolled. ---
    def step(t, h_prev):
        h_new = jnp.tanh(pre_ref[t]
                         + jnp.dot(h_prev, whh_t,
                                   preferred_element_type=jnp.float32))
        hseq_ref[t] = h_new
        return h_new

    h_final = lax.fori_loop(0, S, step, h0_ref[...], unroll=True)
    hs_ref[...] = h_final

    # --- 3) Output head applied once to all timesteps; single contiguous store. ---
    h_all = hseq_ref[...].reshape(S * B, H)
    y = (jnp.dot(h_all, wout_t_ref[...], preferred_element_type=jnp.float32)
         + bout_ref[...])
    out_ref[...] = y.reshape(S, B, O)


def vanilla_rnn_forward(x, h0, params):
    """params = dict(w_ih, w_hh, b_ih, b_hh, w_out, b_out). Returns (out, h_s)."""
    B, S, _I = x.shape
    H = params["w_hh"].shape[0]
    O = params["w_out"].shape[0]

    # Layout plumbing in the wrapper (outside the kernel): time-major x,
    # pre-transposed weights, fused RNN bias.
    x_tm = jnp.transpose(x, (1, 0, 2))                       # (S, B, I)
    bias = (params["b_ih"] + params["b_hh"]).reshape(1, H)   # fused bias
    wih_t = params["w_ih"].T                                 # (I, H)
    whh_t = params["w_hh"].T                                 # (H, H)
    wout_t = params["w_out"].T                               # (H, O)
    bout = params["b_out"].reshape(1, O)

    vmem = pl.BlockSpec(memory_space=pltpu.MemorySpace.VMEM)

    out_tm, h_final = pl.pallas_call(
        rnn_kernel,
        out_shape=(
            jax.ShapeDtypeStruct((S, B, O), jnp.float32),
            jax.ShapeDtypeStruct((B, H), jnp.float32),
        ),
        in_specs=[vmem] * 7,
        out_specs=(vmem, vmem),
        scratch_shapes=[
            pltpu.VMEM((S, B, H), jnp.float32),   # pre-activation (input projection)
            pltpu.VMEM((S, B, H), jnp.float32),   # hidden-state sequence
        ],
    )(x_tm, h0[0], wih_t, whh_t, bias, wout_t, bout)

    out = jnp.transpose(out_tm, (1, 0, 2))                   # (B, S, O) batch_first
    return out, h_final[None]                                # h_s: (1, B, H)


def reference_forward(x, h0, params):
    """Pure-JAX reference mirroring PyTorch semantics, for correctness check."""
    def step(h, x_t):
        h_new = jnp.tanh(x_t @ params["w_ih"].T + params["b_ih"]
                         + h @ params["w_hh"].T + params["b_hh"])
        return h_new, h_new

    xs = jnp.transpose(x, (1, 0, 2))                 # (S, B, I)
    h_final, hs_seq = lax.scan(step, h0[0], xs)      # hs_seq: (S, B, H)
    r_out = jnp.transpose(hs_seq, (1, 0, 2))         # (B, S, H)
    out = r_out @ params["w_out"].T + params["b_out"]
    return out, h_final[None]


def init_params(key, input_size, hidden_size, output_size):
    ks = jax.random.split(key, 6)
    scale = 1.0 / jnp.sqrt(hidden_size)
    return {
        "w_ih": jax.random.uniform(ks[0], (hidden_size, input_size),
                                   jnp.float32, -scale, scale),
        "w_hh": jax.random.uniform(ks[1], (hidden_size, hidden_size),
                                   jnp.float32, -scale, scale),
        "b_ih": jax.random.uniform(ks[2], (hidden_size,),
                                   jnp.float32, -scale, scale),
        "b_hh": jax.random.uniform(ks[3], (hidden_size,),
                                   jnp.float32, -scale, scale),
        "w_out": jax.random.uniform(ks[4], (output_size, hidden_size),
                                    jnp.float32, -scale, scale),
        "b_out": jax.random.uniform(ks[5], (output_size,),
                                    jnp.float32, -scale, scale),
    }


if __name__ == "__main__":
    INPUT_SIZE, HIDDEN_SIZE, OUTPUT_SIZE = 16, 32, 8
    BATCH, SEQ = 2, 8

    key = jax.random.PRNGKey(0)
    k_x, k_h, k_p = jax.random.split(key, 3)

    x = jax.random.normal(k_x, (BATCH, SEQ, INPUT_SIZE), jnp.float32)
    h0 = jax.random.normal(k_h, (1, BATCH, HIDDEN_SIZE), jnp.float32)
    params = init_params(k_p, INPUT_SIZE, HIDDEN_SIZE, OUTPUT_SIZE)

    out, h_s = vanilla_rnn_forward(x, h0, params)
    out = jax.block_until_ready(out)
    h_s = jax.block_until_ready(h_s)

    out_ref, h_s_ref = reference_forward(x, h0, params)
    assert out.shape == (BATCH, SEQ, OUTPUT_SIZE)
    assert h_s.shape == (1, BATCH, HIDDEN_SIZE)
    assert jnp.allclose(out, out_ref, atol=1e-5, rtol=1e-5)
    assert jnp.allclose(h_s, h_s_ref, atol=1e-5, rtol=1e-5)

    print("KERNEL_OK")
</pallas_src>

<mosaic_0001>
module attributes {stable_mosaic.version = 11 : i64} {
  func.func @rnn_kernel(%arg0: memref<8x2x16xf32, #tpu.memory_space<vmem>>, %arg1: memref<2x32xf32, #tpu.memory_space<vmem>>, %arg2: memref<16x32xf32, #tpu.memory_space<vmem>>, %arg3: memref<32x32xf32, #tpu.memory_space<vmem>>, %arg4: memref<1x32xf32, #tpu.memory_space<vmem>>, %arg5: memref<32x8xf32, #tpu.memory_space<vmem>>, %arg6: memref<1x8xf32, #tpu.memory_space<vmem>>, %arg7: memref<8x2x8xf32, #tpu.memory_space<vmem>>, %arg8: memref<2x32xf32, #tpu.memory_space<vmem>>, %arg9: memref<8x2x32xf32, #tpu.memory_space<vmem>>, %arg10: memref<8x2x32xf32, #tpu.memory_space<vmem>>) attributes {dimension_semantics = [], scalar_prefetch = 0 : i64, scratch_operands = 2 : i64, tpu.core_type = #tpu.core_type<tc>} {
    %c0 = arith.constant 0 : index
    %c0_0 = arith.constant 0 : index
    %c0_1 = arith.constant 0 : index
    %0 = vector.load %arg0[%c0, %c0_0, %c0_1] : memref<8x2x16xf32, #tpu.memory_space<vmem>>, vector<8x2x16xf32>
    %1 = vector.shape_cast %0 : vector<8x2x16xf32> to vector<16x16xf32>
    %c0_2 = arith.constant 0 : index
    %c0_3 = arith.constant 0 : index
    %2 = vector.load %arg2[%c0_2, %c0_3] : memref<16x32xf32, #tpu.memory_space<vmem>>, vector<16x32xf32>
    %cst = arith.constant dense<0.000000e+00> : vector<16x32xf32>
    %3 = tpu.matmul %1, %2, %cst {dimension_numbers = #tpu.dot_dimension_numbers<[1], [0], [0], [1], [0, 0, 1, 1], [], []>} : vector<16x16xf32>, vector<16x32xf32>, vector<16x32xf32> -> vector<16x32xf32>
    %c0_4 = arith.constant 0 : index
    %c0_5 = arith.constant 0 : index
    %4 = vector.load %arg4[%c0_4, %c0_5] : memref<1x32xf32, #tpu.memory_space<vmem>>, vector<1x32xf32>
    %5 = vector.broadcast %4 : vector<1x32xf32> to vector<16x32xf32>
    %6 = arith.addf %3, %5 : vector<16x32xf32>
    %7 = vector.shape_cast %6 : vector<16x32xf32> to vector<8x2x32xf32>
    %c0_6 = arith.constant 0 : index
    %c0_7 = arith.constant 0 : index
    %c0_8 = arith.constant 0 : index
    %8 = vector.load %arg9[%c0_6, %c0_7, %c0_8] : memref<8x2x32xf32, #tpu.memory_space<vmem>>, vector<8x2x32xf32>
    tpu.vector_store %arg9[%c0_6, %c0_7, %c0_8], %7 {strides = array<i32>} : memref<8x2x32xf32, #tpu.memory_space<vmem>>, vector<8x2x32xf32>,
    %c0_9 = arith.constant 0 : index
    %c0_10 = arith.constant 0 : index
    %9 = vector.load %arg3[%c0_9, %c0_10] : memref<32x32xf32, #tpu.memory_space<vmem>>, vector<32x32xf32>
    %c0_11 = arith.constant 0 : index
    %c0_12 = arith.constant 0 : index
    %10 = vector.load %arg1[%c0_11, %c0_12] : memref<2x32xf32, #tpu.memory_space<vmem>>, vector<2x32xf32>
    %c0_i32 = arith.constant 0 : i32
    %11 = arith.index_cast %c0_i32 : i32 to index
    %c0_13 = arith.constant 0 : index
    %c0_14 = arith.constant 0 : index
    %12 = vector.load %arg9[%11, %c0_13, %c0_14] : memref<8x2x32xf32, #tpu.memory_space<vmem>>, vector<1x2x32xf32>
    %13 = vector.shape_cast %12 : vector<1x2x32xf32> to vector<2x32xf32>
    %cst_15 = arith.constant dense<0.000000e+00> : vector<2x32xf32>
    %14 = tpu.matmul %10, %9, %cst_15 {dimension_numbers = #tpu.dot_dimension_numbers<[1], [0], [0], [1], [0, 0, 1, 1], [], []>} : vector<2x32xf32>, vector<32x32xf32>, vector<2x32xf32> -> vector<2x32xf32>
    %15 = arith.addf %13, %14 : vector<2x32xf32>
    %16 = math.tanh %15 : vector<2x32xf32>
    %17 = arith.index_cast %c0_i32 : i32 to index
    %c0_16 = arith.constant 0 : index
    %c0_17 = arith.constant 0 : index
    %18 = vector.load %arg10[%17, %c0_16, %c0_17] : memref<8x2x32xf32, #tpu.memory_space<vmem>>, vector<1x2x32xf32>
    %19 = vector.shape_cast %18 : vector<1x2x32xf32> to vector<2x32xf32>
    %20 = vector.shape_cast %16 : vector<2x32xf32> to vector<1x2x32xf32>
    tpu.vector_store %arg10[%17, %c0_16, %c0_17], %20 {strides = array<i32>} : memref<8x2x32xf32, #tpu.memory_space<vmem>>, vector<1x2x32xf32>,
    %c1_i32 = arith.constant 1 : i32
    %21 = arith.index_cast %c1_i32 : i32 to index
    %c0_18 = arith.constant 0 : index
    %c0_19 = arith.constant 0 : index
    %22 = vector.load %arg9[%21, %c0_18, %c0_19] : memref<8x2x32xf32, #tpu.memory_space<vmem>>, vector<1x2x32xf32>
    %23 = vector.shape_cast %22 : vector<1x2x32xf32> to vector<2x32xf32>
    %cst_20 = arith.constant dense<0.000000e+00> : vector<2x32xf32>
    %24 = tpu.matmul %16, %9, %cst_20 {dimension_numbers = #tpu.dot_dimension_numbers<[1], [0], [0], [1], [0, 0, 1, 1], [], []>} : vector<2x32xf32>, vector<32x32xf32>, vector<2x32xf32> -> vector<2x32xf32>
    %25 = arith.addf %23, %24 : vector<2x32xf32>
    %26 = math.tanh %25 : vector<2x32xf32>
    %27 = arith.index_cast %c1_i32 : i32 to index
    %c0_21 = arith.constant 0 : index
    %c0_22 = arith.constant 0 : index
    %28 = vector.load %arg10[%27, %c0_21, %c0_22] : memref<8x2x32xf32, #tpu.memory_space<vmem>>, vector<1x2x32xf32>
    %29 = vector.shape_cast %28 : vector<1x2x32xf32> to vector<2x32xf32>
    %30 = vector.shape_cast %26 : vector<2x32xf32> to vector<1x2x32xf32>
    tpu.vector_store %arg10[%27, %c0_21, %c0_22], %30 {strides = array<i32>} : memref<8x2x32xf32, #tpu.memory_space<vmem>>, vector<1x2x32xf32>,
    %c2_i32 = arith.constant 2 : i32
    %31 = arith.index_cast %c2_i32 : i32 to index
    %c0_23 = arith.constant 0 : index
    %c0_24 = arith.constant 0 : index
    %32 = vector.load %arg9[%31, %c0_23, %c0_24] : memref<8x2x32xf32, #tpu.memory_space<vmem>>, vector<1x2x32xf32>
    %33 = vector.shape_cast %32 : vector<1x2x32xf32> to vector<2x32xf32>
    %cst_25 = arith.constant dense<0.000000e+00> : vector<2x32xf32>
    %34 = tpu.matmul %26, %9, %cst_25 {dimension_numbers = #tpu.dot_dimension_numbers<[1], [0], [0], [1], [0, 0, 1, 1], [], []>} : vector<2x32xf32>, vector<32x32xf32>, vector<2x32xf32> -> vector<2x32xf32>
    %35 = arith.addf %33, %34 : vector<2x32xf32>
    %36 = math.tanh %35 : vector<2x32xf32>
    %37 = arith.index_cast %c2_i32 : i32 to index
    %c0_26 = arith.constant 0 : index
    %c0_27 = arith.constant 0 : index
    %38 = vector.load %arg10[%37, %c0_26, %c0_27] : memref<8x2x32xf32, #tpu.memory_space<vmem>>, vector<1x2x32xf32>
    %39 = vector.shape_cast %38 : vector<1x2x32xf32> to vector<2x32xf32>
    %40 = vector.shape_cast %36 : vector<2x32xf32> to vector<1x2x32xf32>
    tpu.vector_store %arg10[%37, %c0_26, %c0_27], %40 {strides = array<i32>} : memref<8x2x32xf32, #tpu.memory_space<vmem>>, vector<1x2x32xf32>,
    %c3_i32 = arith.constant 3 : i32
    %41 = arith.index_cast %c3_i32 : i32 to index
    %c0_28 = arith.constant 0 : index
    %c0_29 = arith.constant 0 : index
    %42 = vector.load %arg9[%41, %c0_28, %c0_29] : memref<8x2x32xf32, #tpu.memory_space<vmem>>, vector<1x2x32xf32>
    %43 = vector.shape_cast %42 : vector<1x2x32xf32> to vector<2x32xf32>
    %cst_30 = arith.constant dense<0.000000e+00> : vector<2x32xf32>
    %44 = tpu.matmul %36, %9, %cst_30 {dimension_numbers = #tpu.dot_dimension_numbers<[1], [0], [0], [1], [0, 0, 1, 1], [], []>} : vector<2x32xf32>, vector<32x32xf32>, vector<2x32xf32> -> vector<2x32xf32>
    %45 = arith.addf %43, %44 : vector<2x32xf32>
    %46 = math.tanh %45 : vector<2x32xf32>
    %47 = arith.index_cast %c3_i32 : i32 to index
    %c0_31 = arith.constant 0 : index
    %c0_32 = arith.constant 0 : index
    %48 = vector.load %arg10[%47, %c0_31, %c0_32] : memref<8x2x32xf32, #tpu.memory_space<vmem>>, vector<1x2x32xf32>
    %49 = vector.shape_cast %48 : vector<1x2x32xf32> to vector<2x32xf32>
    %50 = vector.shape_cast %46 : vector<2x32xf32> to vector<1x2x32xf32>
    tpu.vector_store %arg10[%47, %c0_31, %c0_32], %50 {strides = array<i32>} : memref<8x2x32xf32, #tpu.memory_space<vmem>>, vector<1x2x32xf32>,
    %c4_i32 = arith.constant 4 : i32
    %51 = arith.index_cast %c4_i32 : i32 to index
    %c0_33 = arith.constant 0 : index
    %c0_34 = arith.constant 0 : index
    %52 = vector.load %arg9[%51, %c0_33, %c0_34] : memref<8x2x32xf32, #tpu.memory_space<vmem>>, vector<1x2x32xf32>
    %53 = vector.shape_cast %52 : vector<1x2x32xf32> to vector<2x32xf32>
    %cst_35 = arith.constant dense<0.000000e+00> : vector<2x32xf32>
    %54 = tpu.matmul %46, %9, %cst_35 {dimension_numbers = #tpu.dot_dimension_numbers<[1], [0], [0], [1], [0, 0, 1, 1], [], []>} : vector<2x32xf32>, vector<32x32xf32>, vector<2x32xf32> -> vector<2x32xf32>
    %55 = arith.addf %53, %54 : vector<2x32xf32>
    %56 = math.tanh %55 : vector<2x32xf32>
    %57 = arith.index_cast %c4_i32 : i32 to index
    %c0_36 = arith.constant 0 : index
    %c0_37 = arith.constant 0 : index
    %58 = vector.load %arg10[%57, %c0_36, %c0_37] : memref<8x2x32xf32, #tpu.memory_space<vmem>>, vector<1x2x32xf32>
    %59 = vector.shape_cast %58 : vector<1x2x32xf32> to vector<2x32xf32>
    %60 = vector.shape_cast %56 : vector<2x32xf32> to vector<1x2x32xf32>
    tpu.vector_store %arg10[%57, %c0_36, %c0_37], %60 {strides = array<i32>} : memref<8x2x32xf32, #tpu.memory_space<vmem>>, vector<1x2x32xf32>,
    %c5_i32 = arith.constant 5 : i32
    %61 = arith.index_cast %c5_i32 : i32 to index
    %c0_38 = arith.constant 0 : index
    %c0_39 = arith.constant 0 : index
    %62 = vector.load %arg9[%61, %c0_38, %c0_39] : memref<8x2x32xf32, #tpu.memory_space<vmem>>, vector<1x2x32xf32>
    %63 = vector.shape_cast %62 : vector<1x2x32xf32> to vector<2x32xf32>
    %cst_40 = arith.constant dense<0.000000e+00> : vector<2x32xf32>
    %64 = tpu.matmul %56, %9, %cst_40 {dimension_numbers = #tpu.dot_dimension_numbers<[1], [0], [0], [1], [0, 0, 1, 1], [], []>} : vector<2x32xf32>, vector<32x32xf32>, vector<2x32xf32> -> vector<2x32xf32>
    %65 = arith.addf %63, %64 : vector<2x32xf32>
    %66 = math.tanh %65 : vector<2x32xf32>
    %67 = arith.index_cast %c5_i32 : i32 to index
    %c0_41 = arith.constant 0 : index
    %c0_42 = arith.constant 0 : index
    %68 = vector.load %arg10[%67, %c0_41, %c0_42] : memref<8x2x32xf32, #tpu.memory_space<vmem>>, vector<1x2x32xf32>
    %69 = vector.shape_cast %68 : vector<1x2x32xf32> to vector<2x32xf32>
    %70 = vector.shape_cast %66 : vector<2x32xf32> to vector<1x2x32xf32>
    tpu.vector_store %arg10[%67, %c0_41, %c0_42], %70 {strides = array<i32>} : memref<8x2x32xf32, #tpu.memory_space<vmem>>, vector<1x2x32xf32>,
    %c6_i32 = arith.constant 6 : i32
    %71 = arith.index_cast %c6_i32 : i32 to index
    %c0_43 = arith.constant 0 : index
    %c0_44 = arith.constant 0 : index
    %72 = vector.load %arg9[%71, %c0_43, %c0_44] : memref<8x2x32xf32, #tpu.memory_space<vmem>>, vector<1x2x32xf32>
    %73 = vector.shape_cast %72 : vector<1x2x32xf32> to vector<2x32xf32>
    %cst_45 = arith.constant dense<0.000000e+00> : vector<2x32xf32>
    %74 = tpu.matmul %66, %9, %cst_45 {dimension_numbers = #tpu.dot_dimension_numbers<[1], [0], [0], [1], [0, 0, 1, 1], [], []>} : vector<2x32xf32>, vector<32x32xf32>, vector<2x32xf32> -> vector<2x32xf32>
    %75 = arith.addf %73, %74 : vector<2x32xf32>
    %76 = math.tanh %75 : vector<2x32xf32>
    %77 = arith.index_cast %c6_i32 : i32 to index
    %c0_46 = arith.constant 0 : index
    %c0_47 = arith.constant 0 : index
    %78 = vector.load %arg10[%77, %c0_46, %c0_47] : memref<8x2x32xf32, #tpu.memory_space<vmem>>, vector<1x2x32xf32>
    %79 = vector.shape_cast %78 : vector<1x2x32xf32> to vector<2x32xf32>
    %80 = vector.shape_cast %76 : vector<2x32xf32> to vector<1x2x32xf32>
    tpu.vector_store %arg10[%77, %c0_46, %c0_47], %80 {strides = array<i32>} : memref<8x2x32xf32, #tpu.memory_space<vmem>>, vector<1x2x32xf32>,
    %c7_i32 = arith.constant 7 : i32
    %81 = arith.index_cast %c7_i32 : i32 to index
    %c0_48 = arith.constant 0 : index
    %c0_49 = arith.constant 0 : index
    %82 = vector.load %arg9[%81, %c0_48, %c0_49] : memref<8x2x32xf32, #tpu.memory_space<vmem>>, vector<1x2x32xf32>
    %83 = vector.shape_cast %82 : vector<1x2x32xf32> to vector<2x32xf32>
    %cst_50 = arith.constant dense<0.000000e+00> : vector<2x32xf32>
    %84 = tpu.matmul %76, %9, %cst_50 {dimension_numbers = #tpu.dot_dimension_numbers<[1], [0], [0], [1], [0, 0, 1, 1], [], []>} : vector<2x32xf32>, vector<32x32xf32>, vector<2x32xf32> -> vector<2x32xf32>
    %85 = arith.addf %83, %84 : vector<2x32xf32>
    %86 = math.tanh %85 : vector<2x32xf32>
    %87 = arith.index_cast %c7_i32 : i32 to index
    %c0_51 = arith.constant 0 : index
    %c0_52 = arith.constant 0 : index
    %88 = vector.load %arg10[%87, %c0_51, %c0_52] : memref<8x2x32xf32, #tpu.memory_space<vmem>>, vector<1x2x32xf32>
    %89 = vector.shape_cast %88 : vector<1x2x32xf32> to vector<2x32xf32>
    %90 = vector.shape_cast %86 : vector<2x32xf32> to vector<1x2x32xf32>
    tpu.vector_store %arg10[%87, %c0_51, %c0_52], %90 {strides = array<i32>} : memref<8x2x32xf32, #tpu.memory_space<vmem>>, vector<1x2x32xf32>,
    %c8_i32 = arith.constant 8 : i32
    %c0_53 = arith.constant 0 : index
    %c0_54 = arith.constant 0 : index
    %91 = vector.load %arg8[%c0_53, %c0_54] : memref<2x32xf32, #tpu.memory_space<vmem>>, vector<2x32xf32>
    tpu.vector_store %arg8[%c0_53, %c0_54], %86 {strides = array<i32>} : memref<2x32xf32, #tpu.memory_space<vmem>>, vector<2x32xf32>,
    %c0_55 = arith.constant 0 : index
    %c0_56 = arith.constant 0 : index
    %c0_57 = arith.constant 0 : index
    %92 = vector.load %arg10[%c0_55, %c0_56, %c0_57] : memref<8x2x32xf32, #tpu.memory_space<vmem>>, vector<8x2x32xf32>
    %93 = vector.shape_cast %92 : vector<8x2x32xf32> to vector<16x32xf32>
    %c0_58 = arith.constant 0 : index
    %c0_59 = arith.constant 0 : index
    %94 = vector.load %arg5[%c0_58, %c0_59] : memref<32x8xf32, #tpu.memory_space<vmem>>, vector<32x8xf32>
    %cst_60 = arith.constant dense<0.000000e+00> : vector<16x8xf32>
    %95 = tpu.matmul %93, %94, %cst_60 {dimension_numbers = #tpu.dot_dimension_numbers<[1], [0], [0], [1], [0, 0, 1, 1], [], []>} : vector<16x32xf32>, vector<32x8xf32>, vector<16x8xf32> -> vector<16x8xf32>
    %c0_61 = arith.constant 0 : index
    %c0_62 = arith.constant 0 : index
    %96 = vector.load %arg6[%c0_61, %c0_62] : memref<1x8xf32, #tpu.memory_space<vmem>>, vector<1x8xf32>
    %97 = vector.broadcast %96 : vector<1x8xf32> to vector<16x8xf32>
    %98 = arith.addf %95, %97 : vector<16x8xf32>
    %99 = vector.shape_cast %98 : vector<16x8xf32> to vector<8x2x8xf32>
    %c0_63 = arith.constant 0 : index
    %c0_64 = arith.constant 0 : index
    %c0_65 = arith.constant 0 : index
    %100 = vector.load %arg7[%c0_63, %c0_64, %c0_65] : memref<8x2x8xf32, #tpu.memory_space<vmem>>, vector<8x2x8xf32>
    tpu.vector_store %arg7[%c0_63, %c0_64, %c0_65], %99 {strides = array<i32>} : memref<8x2x8xf32, #tpu.memory_space<vmem>>, vector<8x2x8xf32>,
    return
  }
}

</mosaic_0001>

<llo_original>
// kernel: tpu_custom_call.1
$region0: #{tpu_custom_call.1}
  #allocation0 [shape = 'u32[]', space=smem, size = 0x4, offset = 0x4, fixed_abs, tag = 'smem constant byte address 0x4 - core index']
  #allocation1 [shape = 'u32[144,128]{1,0:T(1,128)}', space=vmem, size = 0x12000, scoped, tag = 'internal scratch']
  #allocation2 [shape = 'f32[8,2,32]{2,1,0:T(2,128)}', space=vmem, size = 0x2000, scoped, tag = 'scratch operand']
  #allocation3 [shape = 'f32[8,2,32]{2,1,0:T(2,128)}', space=vmem, size = 0x2000, scoped, tag = 'scratch operand']
  %s0 = inlined_call_operand.hbm [shape: f32[8,2,16], index: 0, kind: input, shape index: {}]
  %s1 = inlined_call_operand.vmem [shape: f32[2,32], index: 1, kind: input, shape index: {}]
  %s2 = inlined_call_operand.hbm [shape: f32[16,32], index: 2, kind: input, shape index: {}]
  %s3 = inlined_call_operand.vmem [shape: f32[32,32], index: 3, kind: input, shape index: {}]
  %s4 = inlined_call_operand.vmem [shape: f32[1,32], index: 4, kind: input, shape index: {}]
  %s5 = inlined_call_operand.vmem [shape: f32[32,8], index: 5, kind: input, shape index: {}]
  %s6 = inlined_call_operand.vmem [shape: f32[1,8], index: 6, kind: input, shape index: {}]
  %s7 = inlined_call_operand.hbm [shape: f32[8,2,8], index: 7, kind: output, shape index: {0}]
  %s8 = inlined_call_operand.hbm [shape: f32[2,32], index: 8, kind: output, shape index: {1}]
  %9 = xla_tuple %s7, %s8
  %s10 = sld [smem:[#allocation0]]
  $region54: #{tpu_custom_call.1} parent=0
    _
  %s12 = ssub.s32 1, %s10
  %s13 = scalar_select 0, %s12, %s10
  $region1: #{tpu_custom_call.1} parent=0
    #allocation4 [shape = 'u8[8192]{0}', space=vmem, size = 0x2000, scoped, tag = 'input window, operand 0, single buffered']
    #allocation5 [shape = 's32[1]{0}', space=sflag, size = 0x4, scoped, tag = 'scoped memory for tpu_custom_call.1']
    #allocation6 [shape = 's32[1]{0}', space=sflag, size = 0x4, scoped, tag = 'scoped memory for tpu_custom_call.1']
    #allocation7 [shape = 'u8[8192]{0}', space=vmem, size = 0x2000, scoped, tag = 'input window, operand 2, single buffered']
    #allocation8 [shape = 's32[1]{0}', space=sflag, size = 0x4, scoped, tag = 'scoped memory for tpu_custom_call.1']
    #allocation9 [shape = 'u8[8192]{0}', space=vmem, size = 0x2000, scoped, tag = 'output window, operand 0, single buffered']
    #allocation10 [shape = 'u8[1024]{0}', space=vmem, size = 0x400, scoped, tag = 'output window, operand 1, single buffered']
    #allocation11 [shape = 's32[1]{0}', space=sflag, size = 0x4, scoped, tag = 'scoped memory for tpu_custom_call.1']
    %14 = vsyncpa [#allocation5], 0
    %15 = vsyncpa [#allocation8], 0
    %16 = vsyncpa [#allocation6], 0
    %17 = vsyncpa [#allocation11], 0
    // Predicated region
    $region2: #{tpu_custom_call.1} parent=1 // pred_check
      _
    $region3: #{tpu_custom_call.1} parent=1 // pred_check_branch
      %19 = sbr.rel (0) target = $region5
    $region4: #{tpu_custom_call.1} parent=1 // pred_region
      %s21 = ssub.s32 256, 256
      %22 = vsyncadd [#allocation5], %s21
      %s23 = sshll.u32 [#allocation4], 4
      %s24 = int_to_ptr.vmem [resolvable:$true] %s23
      %29 = dma.hbm_to_vmem [thread:$0]  %s0, 256, %s24, [#allocation5], 32, 32, 2
    $region5: #{tpu_custom_call.1} parent=1 // pred_fallthru
      _
    // Predicated region
    $region6: #{tpu_custom_call.1} parent=1 // pred_check
      _
    $region7: #{tpu_custom_call.1} parent=1 // pred_check_branch
      %31 = sbr.rel (0) target = $region9
    $region8: #{tpu_custom_call.1} parent=1 // pred_region
      _
    $region9: #{tpu_custom_call.1} parent=1 // pred_fallthru
      _
    // Predicated region
    $region10: #{tpu_custom_call.1} parent=1 // pred_check
      _
    $region11: #{tpu_custom_call.1} parent=1 // pred_check_branch
      %33 = sbr.rel (0) target = $region13
    $region12: #{tpu_custom_call.1} parent=1 // pred_region
      %s35 = ssub.s32 256, 256
      %36 = vsyncadd [#allocation8], %s35
      %s37 = sshll.u32 [#allocation7], 4
      %s38 = int_to_ptr.vmem [resolvable:$true] %s37
      %43 = dma.hbm_to_vmem [thread:$0]  %s2, 256, %s38, [#allocation8], 128, 128, 8
    $region13: #{tpu_custom_call.1} parent=1 // pred_fallthru
      _
    // Predicated region
    $region14: #{tpu_custom_call.1} parent=1 // pred_check
      _
    $region15: #{tpu_custom_call.1} parent=1 // pred_check_branch
      %45 = sbr.rel (0) target = $region17
    $region16: #{tpu_custom_call.1} parent=1 // pred_region
      _
    $region17: #{tpu_custom_call.1} parent=1 // pred_fallthru
      _
    // Predicated region
    $region18: #{tpu_custom_call.1} parent=1 // pred_check
      _
    $region19: #{tpu_custom_call.1} parent=1 // pred_check_branch
      %47 = sbr.rel (0) target = $region21
    $region20: #{tpu_custom_call.1} parent=1 // pred_region
      _
    $region21: #{tpu_custom_call.1} parent=1 // pred_fallthru
      _
    // Predicated region
    $region22: #{tpu_custom_call.1} parent=1 // pred_check
      _
    $region23: #{tpu_custom_call.1} parent=1 // pred_check_branch
      %49 = sbr.rel (0) target = $region25
    $region24: #{tpu_custom_call.1} parent=1 // pred_region
      _
    $region25: #{tpu_custom_call.1} parent=1 // pred_fallthru
      _
    // Predicated region
    $region26: #{tpu_custom_call.1} parent=1 // pred_check
      _
    $region27: #{tpu_custom_call.1} parent=1 // pred_check_branch
      %51 = sbr.rel (0) target = $region29
    $region28: #{tpu_custom_call.1} parent=1 // pred_region
      _
    $region29: #{tpu_custom_call.1} parent=1 // pred_fallthru
      _
    // Predicated region
    $region30: #{tpu_custom_call.1} parent=1 // pred_check
      _
    $region31: #{tpu_custom_call.1} parent=1 // pred_check_branch
      %53 = sbr.rel (0) target = $region33
    $region32: #{tpu_custom_call.1} parent=1 // pred_region
      %54 = dma.done [#allocation5], 256
    $region33: #{tpu_custom_call.1} parent=1 // pred_fallthru
      _
    // Predicated region
    $region34: #{tpu_custom_call.1} parent=1 // pred_check
      _
    $region35: #{tpu_custom_call.1} parent=1 // pred_check_branch
      %56 = sbr.rel (0) target = $region37
    $region36: #{tpu_custom_call.1} parent=1 // pred_region
      %57 = dma.done [#allocation8], 256
    $region37: #{tpu_custom_call.1} parent=1 // pred_fallthru
      _
    %v58 = vld [vmem:[#allocation4] sm:$0x3]
    %v59 = vld [vmem:[#allocation4 + $0x2] sm:$0x3]
    %v60 = vld [vmem:[#allocation4 + $0x4] sm:$0x3]
    %v61 = vld [vmem:[#allocation4 + $0x6] sm:$0x3]
    %v62 = vld [vmem:[#allocation4 + $0x8] sm:$0x3]
    %v63 = vld [vmem:[#allocation4 + $0xa] sm:$0x3]
    %v64 = vld [vmem:[#allocation4 + $0xc] sm:$0x3]
    %v65 = vld [vmem:[#allocation4 + $0xe] sm:$0x3]
    %v66 = vld [vmem:[#allocation7] sm:$0xff]
    %v67 = vld [vmem:[#allocation7 + $0x8] sm:$0xff]
    %v68 = vld [vmem:[%s4] sm:$0x1]
    %v70 = vlaneseq
    %v71 = vshrl.u32 %v70, 7
    %v72 = vsub.s32 0, %v71
    %v73 = vrot.slane %v68, %v72
    %v83 = vcombine.low %v58, %v59
    %v84 = vcombine.low %v60, %v61
    %v86 = vunpack.c.l.s4 1983009808
    %v87 = vunpack.c.0.s8 %v86
    %v88 = vlaneseq
    %v89 = vshrl.u32 %v88, 7
    %v90 = vsub.s32 %v87, %v89
    %v91 = vrot.slane %v83, %v90
    %v93 = vunpack.c.l.s4 1983009808
    %v94 = vunpack.c.0.s8 %v93
    %v95 = vlaneseq
    %v96 = vshrl.u32 %v95, 7
    %v97 = vsub.s32 %v94, %v96
    %v98 = vrot.slane %v84, %v97
    %v99 = vcombine.low %v91, %v98
    %v100 = vcombine.low %v62, %v63
    %v101 = vcombine.low %v64, %v65
    %v103 = vunpack.c.l.s4 1983009808
    %v104 = vunpack.c.0.s8 %v103
    %v105 = vlaneseq
    %v106 = vshrl.u32 %v105, 7
    %v107 = vsub.s32 %v104, %v106
    %v108 = vrot.slane %v100, %v107
    %v110 = vunpack.c.l.s4 1983009808
    %v111 = vunpack.c.0.s8 %v110
    %v112 = vlaneseq
    %v113 = vshrl.u32 %v112, 7
    %v114 = vsub.s32 %v111, %v113
    %v115 = vrot.slane %v101, %v114
    %v116 = vcombine.low %v108, %v115
    %vm117 = vcmask 130048
    %v118 = vsel %vm117, %v99, 0
    %v120 = vsel %vm117, %v116, 0
    %122 = vmatprep.subr.mxu0 0.0
    %123 = vmatpush1.msra.mxu0 0.0
    %124 = vmatprep.subr.mxu0 0.0
    %125 = vmatpush1.msra.mxu0 0.0
    %126 = vmatprep.subr.mxu0 0.0
    %127 = vmatpush1.msra.mxu0 0.0
    %128 = vmatprep.subr.mxu0 0.0
    %129 = vmatpush1.msra.mxu0 0.0
    %130 = vmatprep.subr.mxu0 0.0
    %131 = vmatpush1.msra.mxu0 0.0
    %132 = vmatprep.subr.mxu0 0.0
    %133 = vmatpush1.msra.mxu0 0.0
    %134 = vmatprep.subr.mxu0 0.0
    %135 = vmatpush1.msra.mxu0 0.0
    %136 = vmatprep.subr.mxu0 0.0
    %137 = vmatpush1.msra.mxu0 0.0
    %138 = vmatprep.subr.mxu0 0.0
    %139 = vmatpush1.msra.mxu0 0.0
    %140 = vmatprep.subr.mxu0 0.0
    %141 = vmatpush1.msra.mxu0 0.0
    %142 = vmatprep.subr.mxu0 0.0
    %143 = vmatpush1.msra.mxu0 0.0
    %144 = vmatprep.subr.mxu0 0.0
    %145 = vmatpush1.msra.mxu0 0.0
    %146 = vmatprep.subr.mxu0 0.0
    %147 = vmatpush1.msra.mxu0 0.0
    %148 = vmatprep.subr.mxu0 0.0
    %149 = vmatpush1.msra.mxu0 0.0
    %150 = vmatprep.subr.mxu0 0.0
    %151 = vmatpush1.msra.mxu0 %v67
    %152 = vmatprep.subr.mxu0 0.0
    %153 = vmatpush1.msra.mxu0 %v66
    %154 = vmatprep.subr.mxu0 0.0
    %155 = vmatpush2.msra.mxu0 0.0
    %156 = vmatprep.subr.mxu0 0.0
    %157 = vmatpush2.msra.mxu0 0.0
    %158 = vmatprep.subr.mxu0 0.0
    %159 = vmatpush2.msra.mxu0 0.0
    %160 = vmatprep.subr.mxu0 0.0
    %161 = vmatpush2.msra.mxu0 0.0
    %162 = vmatprep.subr.mxu0 0.0
    %163 = vmatpush2.msra.mxu0 0.0
    %164 = vmatprep.subr.mxu0 0.0
    %165 = vmatpush2.msra.mxu0 0.0
    %166 = vmatprep.subr.mxu0 0.0
    %167 = vmatpush2.msra.mxu0 0.0
    %168 = vmatprep.subr.mxu0 0.0
    %169 = vmatpush2.msra.mxu0 0.0
    %170 = vmatprep.subr.mxu0 0.0
    %171 = vmatpush2.msra.mxu0 0.0
    %172 = vmatprep.subr.mxu0 0.0
    %173 = vmatpush2.msra.mxu0 0.0
    %174 = vmatprep.subr.mxu0 0.0
    %175 = vmatpush2.msra.mxu0 0.0
    %176 = vmatprep.subr.mxu0 0.0
    %177 = vmatpush2.msra.mxu0 0.0
    %178 = vmatprep.subr.mxu0 0.0
    %179 = vmatpush2.msra.mxu0 0.0
    %180 = vmatprep.subr.mxu0 0.0
    %181 = vmatpush2.msra.mxu0 0.0
    %182 = vmatprep.subr.mxu0 0.0
    %183 = vmatpush2.msra.mxu0 0.0
    %184 = vmatprep.subr.mxu0 0.0
    %185 = vmatpush2.msra.mxu0 0.0
    %186 = vmatprep.mubr.f32.mxu0 0.0
    %187 = vmatmul.mubr.f32.gmra.mxu0 %v118
    %v188 = vpop.f32.mrf.mxu0
    %v189 = vadd.f32 %v73, %v188
    %v190 = vpop.f32.mrf.mxu0
    %191 = vmatprep.mubr.f32.mxu0 0.0
    %192 = vmatmul.mubr.f32.gmra.mxu0 %v120
    %v193 = vpop.f32.mrf.mxu0
    %v194 = vadd.f32 %v73, %v193
    %v195 = vpop.f32.mrf.mxu0
    %196 = vdwg.mxu0
    %v199 = vcombine.high %v189, %v189
    %v201 = vunpack.c.l.s4 1983009808
    %v202 = vunpack.c.0.s8 %v201
    %v203 = vlaneseq
    %v204 = vshrl.u32 %v203, 7
    %v205 = vsub.s32 %v202, %v204
    %v206 = vrot.slane %v189, %v205
    %v208 = vunpack.c.l.s4 1983009808
    %v209 = vunpack.c.0.s8 %v208
    %v210 = vlaneseq
    %v211 = vshrl.u32 %v210, 7
    %v212 = vsub.s32 %v209, %v211
    %v213 = vrot.slane %v199, %v212
    %v214 = vcombine.high %v206, %v206
    %v215 = vcombine.high %v213, %v213
    %v216 = vcombine.high %v194, %v194
    %v218 = vunpack.c.l.s4 1983009808
    %v219 = vunpack.c.0.s8 %v218
    %v220 = vlaneseq
    %v221 = vshrl.u32 %v220, 7
    %v222 = vsub.s32 %v219, %v221
    %v223 = vrot.slane %v194, %v222
    %v225 = vunpack.c.l.s4 1983009808
    %v226 = vunpack.c.0.s8 %v225
    %v227 = vlaneseq
    %v228 = vshrl.u32 %v227, 7
    %v229 = vsub.s32 %v226, %v228
    %v230 = vrot.slane %v216, %v229
    %v231 = vcombine.high %v223, %v223
    %v232 = vcombine.high %v230, %v230
    %vm241 = vcmask 254976
    %242 = vst.msk [vmem:[#allocation2] sm:$0x3] %vm241, %v206
    %243 = vst.msk [vmem:[#allocation2 + $0x2] sm:$0x3] %vm241, %v214
    %244 = vst.msk [vmem:[#allocation2 + $0x4] sm:$0x3] %vm241, %v213
    %245 = vst.msk [vmem:[#allocation2 + $0x6] sm:$0x3] %vm241, %v215
    %246 = vst.msk [vmem:[#allocation2 + $0x8] sm:$0x3] %vm241, %v223
    %247 = vst.msk [vmem:[#allocation2 + $0xa] sm:$0x3] %vm241, %v231
    %248 = vst.msk [vmem:[#allocation2 + $0xc] sm:$0x3] %vm241, %v230
    %249 = vst.msk [vmem:[#allocation2 + $0xe] sm:$0x3] %vm241, %v232
    %v250 = vld [vmem:[%s3] sm:$0xff]
    %v251 = vld [vmem:[%s3 + $0x8] sm:$0xff]
    %v252 = vld [vmem:[%s3 + $0x10] sm:$0xff]
    %v253 = vld [vmem:[%s3 + $0x18] sm:$0xff]
    %v254 = vld [vmem:[%s1] sm:$0x3]
    %v255 = vld [vmem:[#allocation2] sm:$0x3]
    %vm256 = vcmask 261120
    %v258 = vsel %vm256, %v254, 0
    %260 = vmatprep.subr.mxu0 0.0
    %261 = vmatpush1.msra.mxu0 0.0
    %262 = vmatprep.subr.mxu0 0.0
    %263 = vmatpush1.msra.mxu0 0.0
    %264 = vmatprep.subr.mxu0 0.0
    %265 = vmatpush1.msra.mxu0 0.0
    %266 = vmatprep.subr.mxu0 0.0
    %267 = vmatpush1.msra.mxu0 0.0
    %268 = vmatprep.subr.mxu0 0.0
    %269 = vmatpush1.msra.mxu0 0.0
    %270 = vmatprep.subr.mxu0 0.0
    %271 = vmatpush1.msra.mxu0 0.0
    %272 = vmatprep.subr.mxu0 0.0
    %273 = vmatpush1.msra.mxu0 0.0
    %274 = vmatprep.subr.mxu0 0.0
    %275 = vmatpush1.msra.mxu0 0.0
    %276 = vmatprep.subr.mxu0 0.0
    %277 = vmatpush1.msra.mxu0 0.0
    %278 = vmatprep.subr.mxu0 0.0
    %279 = vmatpush1.msra.mxu0 0.0
    %280 = vmatprep.subr.mxu0 0.0
    %281 = vmatpush1.msra.mxu0 0.0
    %282 = vmatprep.subr.mxu0 0.0
    %283 = vmatpush1.msra.mxu0 0.0
    %284 = vmatprep.subr.mxu0 0.0
    %285 = vmatpush1.msra.mxu0 %v253
    %286 = vmatprep.subr.mxu0 0.0
    %287 = vmatpush1.msra.mxu0 %v252
    %288 = vmatprep.subr.mxu0 0.0
    %289 = vmatpush1.msra.mxu0 %v251
    %290 = vmatprep.subr.mxu0 0.0
    %291 = vmatpush1.msra.mxu0 %v250
    %292 = vmatprep.subr.mxu0 0.0
    %293 = vmatpush2.msra.mxu0 0.0
    %294 = vmatprep.subr.mxu0 0.0
    %295 = vmatpush2.msra.mxu0 0.0
    %296 = vmatprep.subr.mxu0 0.0
    %297 = vmatpush2.msra.mxu0 0.0
    %298 = vmatprep.subr.mxu0 0.0
    %299 = vmatpush2.msra.mxu0 0.0
    %300 = vmatprep.subr.mxu0 0.0
    %301 = vmatpush2.msra.mxu0 0.0
    %302 = vmatprep.subr.mxu0 0.0
    %303 = vmatpush2.msra.mxu0 0.0
    %304 = vmatprep.subr.mxu0 0.0
    %305 = vmatpush2.msra.mxu0 0.0
    %306 = vmatprep.subr.mxu0 0.0
    %307 = vmatpush2.msra.mxu0 0.0
    %308 = vmatprep.subr.mxu0 0.0
    %309 = vmatpush2.msra.mxu0 0.0
    %310 = vmatprep.subr.mxu0 0.0
    %311 = vmatpush2.msra.mxu0 0.0
    %312 = vmatprep.subr.mxu0 0.0
    %313 = vmatpush2.msra.mxu0 0.0
    %314 = vmatprep.subr.mxu0 0.0
    %315 = vmatpush2.msra.mxu0 0.0
    %316 = vmatprep.subr.mxu0 0.0
    %317 = vmatpush2.msra.mxu0 0.0
    %318 = vmatprep.subr.mxu0 0.0
    %319 = vmatpush2.msra.mxu0 0.0
    %320 = vmatprep.subr.mxu0 0.0
    %321 = vmatpush2.msra.mxu0 0.0
    %322 = vmatprep.subr.mxu0 0.0
    %323 = vmatpush2.msra.mxu0 0.0
    %324 = vmatprep.mubr.f32.mxu0 0.0
    %325 = vmatmul.mubr.f32.gmra.mxu0 %v258
    %v326 = vpop.f32.mrf.mxu0
    %v327 = vadd.f32 0.0, %v326
    %v328 = vpop.f32.mrf.mxu0
    %329 = vdwg.mxu0
    %v330 = vadd.f32 %v255, %v327
    %v331 = vtanh.pop %v330
    %332 = vst.msk [vmem:[#allocation3] sm:$0x3] %vm241, %v331
    %s333 = scalar_lea.vmem [#allocation2], 2
    %v334 = vld [vmem:[%s333] sm:$0x3]
    %v336 = vsel %vm256, %v331, 0
    %338 = vmatprep.subr.mxu0 0.0
    %339 = vmatpush1.msra.mxu0 0.0
    %340 = vmatprep.subr.mxu0 0.0
    %341 = vmatpush1.msra.mxu0 0.0
    %342 = vmatprep.subr.mxu0 0.0
    %343 = vmatpush1.msra.mxu0 0.0
    %344 = vmatprep.subr.mxu0 0.0
    %345 = vmatpush1.msra.mxu0 0.0
    %346 = vmatprep.subr.mxu0 0.0
    %347 = vmatpush1.msra.mxu0 0.0
    %348 = vmatprep.subr.mxu0 0.0
    %349 = vmatpush1.msra.mxu0 0.0
    %350 = vmatprep.subr.mxu0 0.0
    %351 = vmatpush1.msra.mxu0 0.0
    %352 = vmatprep.subr.mxu0 0.0
    %353 = vmatpush1.msra.mxu0 0.0
    %354 = vmatprep.subr.mxu0 0.0
    %355 = vmatpush1.msra.mxu0 0.0
    %356 = vmatprep.subr.mxu0 0.0
    %357 = vmatpush1.msra.mxu0 0.0
    %358 = vmatprep.subr.mxu0 0.0
    %359 = vmatpush1.msra.mxu0 0.0
    %360 = vmatprep.subr.mxu0 0.0
    %361 = vmatpush1.msra.mxu0 0.0
    %362 = vmatprep.subr.mxu0 0.0
    %363 = vmatpush1.msra.mxu0 %v253
    %364 = vmatprep.subr.mxu0 0.0
    %365 = vmatpush1.msra.mxu0 %v252
    %366 = vmatprep.subr.mxu0 0.0
    %367 = vmatpush1.msra.mxu0 %v251
    %368 = vmatprep.subr.mxu0 0.0
    %369 = vmatpush1.msra.mxu0 %v250
    %370 = vmatprep.subr.mxu0 0.0
    %371 = vmatpush2.msra.mxu0 0.0
    %372 = vmatprep.subr.mxu0 0.0
    %373 = vmatpush2.msra.mxu0 0.0
    %374 = vmatprep.subr.mxu0 0.0
    %375 = vmatpush2.msra.mxu0 0.0
    %376 = vmatprep.subr.mxu0 0.0
    %377 = vmatpush2.msra.mxu0 0.0
    %378 = vmatprep.subr.mxu0 0.0
    %379 = vmatpush2.msra.mxu0 0.0
    %380 = vmatprep.subr.mxu0 0.0
    %381 = vmatpush2.msra.mxu0 0.0
    %382 = vmatprep.subr.mxu0 0.0
    %383 = vmatpush2.msra.mxu0 0.0
    %384 = vmatprep.subr.mxu0 0.0
    %385 = vmatpush2.msra.mxu0 0.0
    %386 = vmatprep.subr.mxu0 0.0
    %387 = vmatpush2.msra.mxu0 0.0
    %388 = vmatprep.subr.mxu0 0.0
    %389 = vmatpush2.msra.mxu0 0.0
    %390 = vmatprep.subr.mxu0 0.0
    %391 = vmatpush2.msra.mxu0 0.0
    %392 = vmatprep.subr.mxu0 0.0
    %393 = vmatpush2.msra.mxu0 0.0
    %394 = vmatprep.subr.mxu0 0.0
    %395 = vmatpush2.msra.mxu0 0.0
    %396 = vmatprep.subr.mxu0 0.0
    %397 = vmatpush2.msra.mxu0 0.0
    %398 = vmatprep.subr.mxu0 0.0
    %399 = vmatpush2.msra.mxu0 0.0
    %400 = vmatprep.subr.mxu0 0.0
    %401 = vmatpush2.msra.mxu0 0.0
    %402 = vmatprep.mubr.f32.mxu0 0.0
    %403 = vmatmul.mubr.f32.gmra.mxu0 %v336
    %v404 = vpop.f32.mrf.mxu0
    %v405 = vadd.f32 0.0, %v404
    %v406 = vpop.f32.mrf.mxu0
    %407 = vdwg.mxu0
    %v408 = vadd.f32 %v334, %v405
    %v409 = vtanh.pop %v408
    %s410 = scalar_lea.vmem [#allocation3], 2
    %411 = vst.msk [vmem:[%s410] sm:$0x3] %vm241, %v409
    %s412 = scalar_lea.vmem [#allocation2], 4
    %v413 = vld [vmem:[%s412] sm:$0x3]
    %v415 = vsel %vm256, %v409, 0
    %417 = vmatprep.subr.mxu0 0.0
    %418 = vmatpush1.msra.mxu0 0.0
    %419 = vmatprep.subr.mxu0 0.0
    %420 = vmatpush1.msra.mxu0 0.0
    %421 = vmatprep.subr.mxu0 0.0
    %422 = vmatpush1.msra.mxu0 0.0
    %423 = vmatprep.subr.mxu0 0.0
    %424 = vmatpush1.msra.mxu0 0.0
    %425 = vmatprep.subr.mxu0 0.0
    %426 = vmatpush1.msra.mxu0 0.0
    %427 = vmatprep.subr.mxu0 0.0
    %428 = vmatpush1.msra.mxu0 0.0
    %429 = vmatprep.subr.mxu0 0.0
    %430 = vmatpush1.msra.mxu0 0.0
    %431 = vmatprep.subr.mxu0 0.0
    %432 = vmatpush1.msra.mxu0 0.0
    %433 = vmatprep.subr.mxu0 0.0
    %434 = vmatpush1.msra.mxu0 0.0
    %435 = vmatprep.subr.mxu0 0.0
    %436 = vmatpush1.msra.mxu0 0.0
    %437 = vmatprep.subr.mxu0 0.0
    %438 = vmatpush1.msra.mxu0 0.0
    %439 = vmatprep.subr.mxu0 0.0
    %440 = vmatpush1.msra.mxu0 0.0
    %441 = vmatprep.subr.mxu0 0.0
    %442 = vmatpush1.msra.mxu0 %v253
    %443 = vmatprep.subr.mxu0 0.0
    %444 = vmatpush1.msra.mxu0 %v252
    %445 = vmatprep.subr.mxu0 0.0
    %446 = vmatpush1.msra.mxu0 %v251
    %447 = vmatprep.subr.mxu0 0.0
    %448 = vmatpush1.msra.mxu0 %v250
    %449 = vmatprep.subr.mxu0 0.0
    %450 = vmatpush2.msra.mxu0 0.0
    %451 = vmatprep.subr.mxu0 0.0
    %452 = vmatpush2.msra.mxu0 0.0
    %453 = vmatprep.subr.mxu0 0.0
    %454 = vmatpush2.msra.mxu0 0.0
    %455 = vmatprep.subr.mxu0 0.0
    %456 = vmatpush2.msra.mxu0 0.0
    %457 = vmatprep.subr.mxu0 0.0
    %458 = vmatpush2.msra.mxu0 0.0
    %459 = vmatprep.subr.mxu0 0.0
    %460 = vmatpush2.msra.mxu0 0.0
    %461 = vmatprep.subr.mxu0 0.0
    %462 = vmatpush2.msra.mxu0 0.0
    %463 = vmatprep.subr.mxu0 0.0
    %464 = vmatpush2.msra.mxu0 0.0
    %465 = vmatprep.subr.mxu0 0.0
    %466 = vmatpush2.msra.mxu0 0.0
    %467 = vmatprep.subr.mxu0 0.0
    %468 = vmatpush2.msra.mxu0 0.0
    %469 = vmatprep.subr.mxu0 0.0
    %470 = vmatpush2.msra.mxu0 0.0
    %471 = vmatprep.subr.mxu0 0.0
    %472 = vmatpush2.msra.mxu0 0.0
    %473 = vmatprep.subr.mxu0 0.0
    %474 = vmatpush2.msra.mxu0 0.0
    %475 = vmatprep.subr.mxu0 0.0
    %476 = vmatpush2.msra.mxu0 0.0
    %477 = vmatprep.subr.mxu0 0.0
    %478 = vmatpush2.msra.mxu0 0.0
    %479 = vmatprep.subr.mxu0 0.0
    %480 = vmatpush2.msra.mxu0 0.0
    %481 = vmatprep.mubr.f32.mxu0 0.0
    %482 = vmatmul.mubr.f32.gmra.mxu0 %v415
    %v483 = vpop.f32.mrf.mxu0
    %v484 = vadd.f32 0.0, %v483
    %v485 = vpop.f32.mrf.mxu0
    %486 = vdwg.mxu0
    %v487 = vadd.f32 %v413, %v484
    %v488 = vtanh.pop %v487
    %s489 = scalar_lea.vmem [#allocation3], 4
    %490 = vst.msk [vmem:[%s489] sm:$0x3] %vm241, %v488
    %s491 = scalar_lea.vmem [#allocation2], 6
    %v492 = vld [vmem:[%s491] sm:$0x3]
    %v494 = vsel %vm256, %v488, 0
    %496 = vmatprep.subr.mxu0 0.0
    %497 = vmatpush1.msra.mxu0 0.0
    %498 = vmatprep.subr.mxu0 0.0
    %499 = vmatpush1.msra.mxu0 0.0
    %500 = vmatprep.subr.mxu0 0.0
    %501 = vmatpush1.msra.mxu0 0.0
    %502 = vmatprep.subr.mxu0 0.0
    %503 = vmatpush1.msra.mxu0 0.0
    %504 = vmatprep.subr.mxu0 0.0
    %505 = vmatpush1.msra.mxu0 0.0
    %506 = vmatprep.subr.mxu0 0.0
    %507 = vmatpush1.msra.mxu0 0.0
    %508 = vmatprep.subr.mxu0 0.0
    %509 = vmatpush1.msra.mxu0 0.0
    %510 = vmatprep.subr.mxu0 0.0
    %511 = vmatpush1.msra.mxu0 0.0
    %512 = vmatprep.subr.mxu0 0.0
    %513 = vmatpush1.msra.mxu0 0.0
    %514 = vmatprep.subr.mxu0 0.0
    %515 = vmatpush1.msra.mxu0 0.0
    %516 = vmatprep.subr.mxu0 0.0
    %517 = vmatpush1.msra.mxu0 0.0
    %518 = vmatprep.subr.mxu0 0.0
    %519 = vmatpush1.msra.mxu0 0.0
    %520 = vmatprep.subr.mxu0 0.0
    %521 = vmatpush1.msra.mxu0 %v253
    %522 = vmatprep.subr.mxu0 0.0
    %523 = vmatpush1.msra.mxu0 %v252
    %524 = vmatprep.subr.mxu0 0.0
    %525 = vmatpush1.msra.mxu0 %v251
    %526 = vmatprep.subr.mxu0 0.0
    %527 = vmatpush1.msra.mxu0 %v250
    %528 = vmatprep.subr.mxu0 0.0
    %529 = vmatpush2.msra.mxu0 0.0
    %530 = vmatprep.subr.mxu0 0.0
    %531 = vmatpush2.msra.mxu0 0.0
    %532 = vmatprep.subr.mxu0 0.0
    %533 = vmatpush2.msra.mxu0 0.0
    %534 = vmatprep.subr.mxu0 0.0
    %535 = vmatpush2.msra.mxu0 0.0
    %536 = vmatprep.subr.mxu0 0.0
    %537 = vmatpush2.msra.mxu0 0.0
    %538 = vmatprep.subr.mxu0 0.0
    %539 = vmatpush2.msra.mxu0 0.0
    %540 = vmatprep.subr.mxu0 0.0
    %541 = vmatpush2.msra.mxu0 0.0
    %542 = vmatprep.subr.mxu0 0.0
    %543 = vmatpush2.msra.mxu0 0.0
    %544 = vmatprep.subr.mxu0 0.0
    %545 = vmatpush2.msra.mxu0 0.0
    %546 = vmatprep.subr.mxu0 0.0
    %547 = vmatpush2.msra.mxu0 0.0
    %548 = vmatprep.subr.mxu0 0.0
    %549 = vmatpush2.msra.mxu0 0.0
    %550 = vmatprep.subr.mxu0 0.0
    %551 = vmatpush2.msra.mxu0 0.0
    %552 = vmatprep.subr.mxu0 0.0
    %553 = vmatpush2.msra.mxu0 0.0
    %554 = vmatprep.subr.mxu0 0.0
    %555 = vmatpush2.msra.mxu0 0.0
    %556 = vmatprep.subr.mxu0 0.0
    %557 = vmatpush2.msra.mxu0 0.0
    %558 = vmatprep.subr.mxu0 0.0
    %559 = vmatpush2.msra.mxu0 0.0
    %560 = vmatprep.mubr.f32.mxu0 0.0
    %561 = vmatmul.mubr.f32.gmra.mxu0 %v494
    %v562 = vpop.f32.mrf.mxu0
    %v563 = vadd.f32 0.0, %v562
    %v564 = vpop.f32.mrf.mxu0
    %565 = vdwg.mxu0
    %v566 = vadd.f32 %v492, %v563
    %v567 = vtanh.pop %v566
    %s568 = scalar_lea.vmem [#allocation3], 6
    %569 = vst.msk [vmem:[%s568] sm:$0x3] %vm241, %v567
    %s570 = scalar_lea.vmem [#allocation2], 8
    %v571 = vld [vmem:[%s570] sm:$0x3]
    %v573 = vsel %vm256, %v567, 0
    %575 = vmatprep.subr.mxu0 0.0
    %576 = vmatpush1.msra.mxu0 0.0
    %577 = vmatprep.subr.mxu0 0.0
    %578 = vmatpush1.msra.mxu0 0.0
    %579 = vmatprep.subr.mxu0 0.0
    %580 = vmatpush1.msra.mxu0 0.0
    %581 = vmatprep.subr.mxu0 0.0
    %582 = vmatpush1.msra.mxu0 0.0
    %583 = vmatprep.subr.mxu0 0.0
    %584 = vmatpush1.msra.mxu0 0.0
    %585 = vmatprep.subr.mxu0 0.0
    %586 = vmatpush1.msra.mxu0 0.0
    %587 = vmatprep.subr.mxu0 0.0
    %588 = vmatpush1.msra.mxu0 0.0
    %589 = vmatprep.subr.mxu0 0.0
    %590 = vmatpush1.msra.mxu0 0.0
    %591 = vmatprep.subr.mxu0 0.0
    %592 = vmatpush1.msra.mxu0 0.0
    %593 = vmatprep.subr.mxu0 0.0
    %594 = vmatpush1.msra.mxu0 0.0
    %595 = vmatprep.subr.mxu0 0.0
    %596 = vmatpush1.msra.mxu0 0.0
    %597 = vmatprep.subr.mxu0 0.0
    %598 = vmatpush1.msra.mxu0 0.0
    %599 = vmatprep.subr.mxu0 0.0
    %600 = vmatpush1.msra.mxu0 %v253
    %601 = vmatprep.subr.mxu0 0.0
    %602 = vmatpush1.msra.mxu0 %v252
    %603 = vmatprep.subr.mxu0 0.0
    %604 = vmatpush1.msra.mxu0 %v251
    %605 = vmatprep.subr.mxu0 0.0
    %606 = vmatpush1.msra.mxu0 %v250
    %607 = vmatprep.subr.mxu0 0.0
    %608 = vmatpush2.msra.mxu0 0.0
    %609 = vmatprep.subr.mxu0 0.0
    %610 = vmatpush2.msra.mxu0 0.0
    %611 = vmatprep.subr.mxu0 0.0
    %612 = vmatpush2.msra.mxu0 0.0
    %613 = vmatprep.subr.mxu0 0.0
    %614 = vmatpush2.msra.mxu0 0.0
    %615 = vmatprep.subr.mxu0 0.0
    %616 = vmatpush2.msra.mxu0 0.0
    %617 = vmatprep.subr.mxu0 0.0
    %618 = vmatpush2.msra.mxu0 0.0
    %619 = vmatprep.subr.mxu0 0.0
    %620 = vmatpush2.msra.mxu0 0.0
    %621 = vmatprep.subr.mxu0 0.0
    %622 = vmatpush2.msra.mxu0 0.0
    %623 = vmatprep.subr.mxu0 0.0
    %624 = vmatpush2.msra.mxu0 0.0
    %625 = vmatprep.subr.mxu0 0.0
    %626 = vmatpush2.msra.mxu0 0.0
    %627 = vmatprep.subr.mxu0 0.0
    %628 = vmatpush2.msra.mxu0 0.0
    %629 = vmatprep.subr.mxu0 0.0
    %630 = vmatpush2.msra.mxu0 0.0
    %631 = vmatprep.subr.mxu0 0.0
    %632 = vmatpush2.msra.mxu0 0.0
    %633 = vmatprep.subr.mxu0 0.0
    %634 = vmatpush2.msra.mxu0 0.0
    %635 = vmatprep.subr.mxu0 0.0
    %636 = vmatpush2.msra.mxu0 0.0
    %637 = vmatprep.subr.mxu0 0.0
    %638 = vmatpush2.msra.mxu0 0.0
    %639 = vmatprep.mubr.f32.mxu0 0.0
    %640 = vmatmul.mubr.f32.gmra.mxu0 %v573
    %v641 = vpop.f32.mrf.mxu0
    %v642 = vadd.f32 0.0, %v641
    %v643 = vpop.f32.mrf.mxu0
    %644 = vdwg.mxu0
    %v645 = vadd.f32 %v571, %v642
    %v646 = vtanh.pop %v645
    %s647 = scalar_lea.vmem [#allocation3], 8
    %648 = vst.msk [vmem:[%s647] sm:$0x3] %vm241, %v646
    %s649 = scalar_lea.vmem [#allocation2], 10
    %v650 = vld [vmem:[%s649] sm:$0x3]
    %v652 = vsel %vm256, %v646, 0
    %654 = vmatprep.subr.mxu0 0.0
    %655 = vmatpush1.msra.mxu0 0.0
    %656 = vmatprep.subr.mxu0 0.0
    %657 = vmatpush1.msra.mxu0 0.0
    %658 = vmatprep.subr.mxu0 0.0
    %659 = vmatpush1.msra.mxu0 0.0
    %660 = vmatprep.subr.mxu0 0.0
    %661 = vmatpush1.msra.mxu0 0.0
    %662 = vmatprep.subr.mxu0 0.0
    %663 = vmatpush1.msra.mxu0 0.0
    %664 = vmatprep.subr.mxu0 0.0
    %665 = vmatpush1.msra.mxu0 0.0
    %666 = vmatprep.subr.mxu0 0.0
    %667 = vmatpush1.msra.mxu0 0.0
    %668 = vmatprep.subr.mxu0 0.0
    %669 = vmatpush1.msra.mxu0 0.0
    %670 = vmatprep.subr.mxu0 0.0
    %671 = vmatpush1.msra.mxu0 0.0
    %672 = vmatprep.subr.mxu0 0.0
    %673 = vmatpush1.msra.mxu0 0.0
    %674 = vmatprep.subr.mxu0 0.0
    %675 = vmatpush1.msra.mxu0 0.0
    %676 = vmatprep.subr.mxu0 0.0
    %677 = vmatpush1.msra.mxu0 0.0
    %678 = vmatprep.subr.mxu0 0.0
    %679 = vmatpush1.msra.mxu0 %v253
    %680 = vmatprep.subr.mxu0 0.0
    %681 = vmatpush1.msra.mxu0 %v252
    %682 = vmatprep.subr.mxu0 0.0
    %683 = vmatpush1.msra.mxu0 %v251
    %684 = vmatprep.subr.mxu0 0.0
    %685 = vmatpush1.msra.mxu0 %v250
    %686 = vmatprep.subr.mxu0 0.0
    %687 = vmatpush2.msra.mxu0 0.0
    %688 = vmatprep.subr.mxu0 0.0
    %689 = vmatpush2.msra.mxu0 0.0
    %690 = vmatprep.subr.mxu0 0.0
    %691 = vmatpush2.msra.mxu0 0.0
    %692 = vmatprep.subr.mxu0 0.0
    %693 = vmatpush2.msra.mxu0 0.0
    %694 = vmatprep.subr.mxu0 0.0
    %695 = vmatpush2.msra.mxu0 0.0
    %696 = vmatprep.subr.mxu0 0.0
    %697 = vmatpush2.msra.mxu0 0.0
    %698 = vmatprep.subr.mxu0 0.0
    %699 = vmatpush2.msra.mxu0 0.0
    %700 = vmatprep.subr.mxu0 0.0
    %701 = vmatpush2.msra.mxu0 0.0
    %702 = vmatprep.subr.mxu0 0.0
    %703 = vmatpush2.msra.mxu0 0.0
    %704 = vmatprep.subr.mxu0 0.0
    %705 = vmatpush2.msra.mxu0 0.0
    %706 = vmatprep.subr.mxu0 0.0
    %707 = vmatpush2.msra.mxu0 0.0
    %708 = vmatprep.subr.mxu0 0.0
    %709 = vmatpush2.msra.mxu0 0.0
    %710 = vmatprep.subr.mxu0 0.0
    %711 = vmatpush2.msra.mxu0 0.0
    %712 = vmatprep.subr.mxu0 0.0
    %713 = vmatpush2.msra.mxu0 0.0
    %714 = vmatprep.subr.mxu0 0.0
    %715 = vmatpush2.msra.mxu0 0.0
    %716 = vmatprep.subr.mxu0 0.0
    %717 = vmatpush2.msra.mxu0 0.0
    %718 = vmatprep.mubr.f32.mxu0 0.0
    %719 = vmatmul.mubr.f32.gmra.mxu0 %v652
    %v720 = vpop.f32.mrf.mxu0
    %v721 = vadd.f32 0.0, %v720
    %v722 = vpop.f32.mrf.mxu0
    %723 = vdwg.mxu0
    %v724 = vadd.f32 %v650, %v721
    %v725 = vtanh.pop %v724
    %s726 = scalar_lea.vmem [#allocation3], 10
    %727 = vst.msk [vmem:[%s726] sm:$0x3] %vm241, %v725
    %s728 = scalar_lea.vmem [#allocation2], 12
    %v729 = vld [vmem:[%s728] sm:$0x3]
    %v731 = vsel %vm256, %v725, 0
    %733 = vmatprep.subr.mxu0 0.0
    %734 = vmatpush1.msra.mxu0 0.0
    %735 = vmatprep.subr.mxu0 0.0
    %736 = vmatpush1.msra.mxu0 0.0
    %737 = vmatprep.subr.mxu0 0.0
    %738 = vmatpush1.msra.mxu0 0.0
    %739 = vmatprep.subr.mxu0 0.0
    %740 = vmatpush1.msra.mxu0 0.0
    %741 = vmatprep.subr.mxu0 0.0
    %742 = vmatpush1.msra.mxu0 0.0
    %743 = vmatprep.subr.mxu0 0.0
    %744 = vmatpush1.msra.mxu0 0.0
    %745 = vmatprep.subr.mxu0 0.0
    %746 = vmatpush1.msra.mxu0 0.0
    %747 = vmatprep.subr.mxu0 0.0
    %748 = vmatpush1.msra.mxu0 0.0
    %749 = vmatprep.subr.mxu0 0.0
    %750 = vmatpush1.msra.mxu0 0.0
    %751 = vmatprep.subr.mxu0 0.0
    %752 = vmatpush1.msra.mxu0 0.0
    %753 = vmatprep.subr.mxu0 0.0
    %754 = vmatpush1.msra.mxu0 0.0
    %755 = vmatprep.subr.mxu0 0.0
    %756 = vmatpush1.msra.mxu0 0.0
    %757 = vmatprep.subr.mxu0 0.0
    %758 = vmatpush1.msra.mxu0 %v253
    %759 = vmatprep.subr.mxu0 0.0
    %760 = vmatpush1.msra.mxu0 %v252
    %761 = vmatprep.subr.mxu0 0.0
    %762 = vmatpush1.msra.mxu0 %v251
    %763 = vmatprep.subr.mxu0 0.0
    %764 = vmatpush1.msra.mxu0 %v250
    %765 = vmatprep.subr.mxu0 0.0
    %766 = vmatpush2.msra.mxu0 0.0
    %767 = vmatprep.subr.mxu0 0.0
    %768 = vmatpush2.msra.mxu0 0.0
    %769 = vmatprep.subr.mxu0 0.0
    %770 = vmatpush2.msra.mxu0 0.0
    %771 = vmatprep.subr.mxu0 0.0
    %772 = vmatpush2.msra.mxu0 0.0
    %773 = vmatprep.subr.mxu0 0.0
    %774 = vmatpush2.msra.mxu0 0.0
    %775 = vmatprep.subr.mxu0 0.0
    %776 = vmatpush2.msra.mxu0 0.0
    %777 = vmatprep.subr.mxu0 0.0
    %778 = vmatpush2.msra.mxu0 0.0
    %779 = vmatprep.subr.mxu0 0.0
    %780 = vmatpush2.msra.mxu0 0.0
    %781 = vmatprep.subr.mxu0 0.0
    %782 = vmatpush2.msra.mxu0 0.0
    %783 = vmatprep.subr.mxu0 0.0
    %784 = vmatpush2.msra.mxu0 0.0
    %785 = vmatprep.subr.mxu0 0.0
    %786 = vmatpush2.msra.mxu0 0.0
    %787 = vmatprep.subr.mxu0 0.0
    %788 = vmatpush2.msra.mxu0 0.0
    %789 = vmatprep.subr.mxu0 0.0
    %790 = vmatpush2.msra.mxu0 0.0
    %791 = vmatprep.subr.mxu0 0.0
    %792 = vmatpush2.msra.mxu0 0.0
    %793 = vmatprep.subr.mxu0 0.0
    %794 = vmatpush2.msra.mxu0 0.0
    %795 = vmatprep.subr.mxu0 0.0
    %796 = vmatpush2.msra.mxu0 0.0
    %797 = vmatprep.mubr.f32.mxu0 0.0
    %798 = vmatmul.mubr.f32.gmra.mxu0 %v731
    %v799 = vpop.f32.mrf.mxu0
    %v800 = vadd.f32 0.0, %v799
    %v801 = vpop.f32.mrf.mxu0
    %802 = vdwg.mxu0
    %v803 = vadd.f32 %v729, %v800
    %v804 = vtanh.pop %v803
    %s805 = scalar_lea.vmem [#allocation3], 12
    %806 = vst.msk [vmem:[%s805] sm:$0x3] %vm241, %v804
    %s807 = scalar_lea.vmem [#allocation2], 14
    %v808 = vld [vmem:[%s807] sm:$0x3]
    %v810 = vsel %vm256, %v804, 0
    %812 = vmatprep.subr.mxu0 0.0
    %813 = vmatpush1.msra.mxu0 0.0
    %814 = vmatprep.subr.mxu0 0.0
    %815 = vmatpush1.msra.mxu0 0.0
    %816 = vmatprep.subr.mxu0 0.0
    %817 = vmatpush1.msra.mxu0 0.0
    %818 = vmatprep.subr.mxu0 0.0
    %819 = vmatpush1.msra.mxu0 0.0
    %820 = vmatprep.subr.mxu0 0.0
    %821 = vmatpush1.msra.mxu0 0.0
    %822 = vmatprep.subr.mxu0 0.0
    %823 = vmatpush1.msra.mxu0 0.0
    %824 = vmatprep.subr.mxu0 0.0
    %825 = vmatpush1.msra.mxu0 0.0
    %826 = vmatprep.subr.mxu0 0.0
    %827 = vmatpush1.msra.mxu0 0.0
    %828 = vmatprep.subr.mxu0 0.0
    %829 = vmatpush1.msra.mxu0 0.0
    %830 = vmatprep.subr.mxu0 0.0
    %831 = vmatpush1.msra.mxu0 0.0
    %832 = vmatprep.subr.mxu0 0.0
    %833 = vmatpush1.msra.mxu0 0.0
    %834 = vmatprep.subr.mxu0 0.0
    %835 = vmatpush1.msra.mxu0 0.0
    %836 = vmatprep.subr.mxu0 0.0
    %837 = vmatpush1.msra.mxu0 %v253
    %838 = vmatprep.subr.mxu0 0.0
    %839 = vmatpush1.msra.mxu0 %v252
    %840 = vmatprep.subr.mxu0 0.0
    %841 = vmatpush1.msra.mxu0 %v251
    %842 = vmatprep.subr.mxu0 0.0
    %843 = vmatpush1.msra.mxu0 %v250
    %844 = vmatprep.subr.mxu0 0.0
    %845 = vmatpush2.msra.mxu0 0.0
    %846 = vmatprep.subr.mxu0 0.0
    %847 = vmatpush2.msra.mxu0 0.0
    %848 = vmatprep.subr.mxu0 0.0
    %849 = vmatpush2.msra.mxu0 0.0
    %850 = vmatprep.subr.mxu0 0.0
    %851 = vmatpush2.msra.mxu0 0.0
    %852 = vmatprep.subr.mxu0 0.0
    %853 = vmatpush2.msra.mxu0 0.0
    %854 = vmatprep.subr.mxu0 0.0
    %855 = vmatpush2.msra.mxu0 0.0
    %856 = vmatprep.subr.mxu0 0.0
    %857 = vmatpush2.msra.mxu0 0.0
    %858 = vmatprep.subr.mxu0 0.0
    %859 = vmatpush2.msra.mxu0 0.0
    %860 = vmatprep.subr.mxu0 0.0
    %861 = vmatpush2.msra.mxu0 0.0
    %862 = vmatprep.subr.mxu0 0.0
    %863 = vmatpush2.msra.mxu0 0.0
    %864 = vmatprep.subr.mxu0 0.0
    %865 = vmatpush2.msra.mxu0 0.0
    %866 = vmatprep.subr.mxu0 0.0
    %867 = vmatpush2.msra.mxu0 0.0
    %868 = vmatprep.subr.mxu0 0.0
    %869 = vmatpush2.msra.mxu0 0.0
    %870 = vmatprep.subr.mxu0 0.0
    %871 = vmatpush2.msra.mxu0 0.0
    %872 = vmatprep.subr.mxu0 0.0
    %873 = vmatpush2.msra.mxu0 0.0
    %874 = vmatprep.subr.mxu0 0.0
    %875 = vmatpush2.msra.mxu0 0.0
    %876 = vmatprep.mubr.f32.mxu0 0.0
    %877 = vmatmul.mubr.f32.gmra.mxu0 %v810
    %v878 = vpop.f32.mrf.mxu0
    %v879 = vadd.f32 0.0, %v878
    %v880 = vpop.f32.mrf.mxu0
    %881 = vdwg.mxu0
    %v882 = vadd.f32 %v808, %v879
    %v883 = vtanh.pop %v882
    %s884 = scalar_lea.vmem [#allocation3], 14
    %885 = vst.msk [vmem:[%s884] sm:$0x3] %vm241, %v883
    %886 = vst.msk [vmem:[#allocation10] sm:$0x3] %vm241, %v883
    %v887 = vld [vmem:[#allocation3] sm:$0x3]
    %v888 = vld [vmem:[#allocation3 + $0x2] sm:$0x3]
    %v889 = vld [vmem:[#allocation3 + $0x4] sm:$0x3]
    %v890 = vld [vmem:[#allocation3 + $0x6] sm:$0x3]
    %v891 = vld [vmem:[#allocation3 + $0x8] sm:$0x3]
    %v892 = vld [vmem:[#allocation3 + $0xa] sm:$0x3]
    %v893 = vld [vmem:[#allocation3 + $0xc] sm:$0x3]
    %v894 = vld [vmem:[#allocation3 + $0xe] sm:$0x3]
    %v895 = vld [vmem:[%s5] sm:$0xff]
    %v896 = vld [vmem:[%s5 + $0x8] sm:$0xff]
    %v897 = vld [vmem:[%s5 + $0x10] sm:$0xff]
    %v898 = vld [vmem:[%s5 + $0x18] sm:$0xff]
    %v899 = vld [vmem:[%s6] sm:$0x1]
    %v901 = vlaneseq
    %v902 = vshrl.u32 %v901, 7
    %v903 = vsub.s32 0, %v902
    %v904 = vrot.slane %v899, %v903
    %v914 = vcombine.low %v887, %v888
    %v915 = vcombine.low %v889, %v890
    %v917 = vunpack.c.l.s4 1983009808
    %v918 = vunpack.c.0.s8 %v917
    %v919 = vlaneseq
    %v920 = vshrl.u32 %v919, 7
    %v921 = vsub.s32 %v918, %v920
    %v922 = vrot.slane %v914, %v921
    %v924 = vunpack.c.l.s4 1983009808
    %v925 = vunpack.c.0.s8 %v924
    %v926 = vlaneseq
    %v927 = vshrl.u32 %v926, 7
    %v928 = vsub.s32 %v925, %v927
    %v929 = vrot.slane %v915, %v928
    %v930 = vcombine.low %v922, %v929
    %v931 = vcombine.low %v891, %v892
    %v932 = vcombine.low %v893, %v894
    %v934 = vunpack.c.l.s4 1983009808
    %v935 = vunpack.c.0.s8 %v934
    %v936 = vlaneseq
    %v937 = vshrl.u32 %v936, 7
    %v938 = vsub.s32 %v935, %v937
    %v939 = vrot.slane %v931, %v938
    %v941 = vunpack.c.l.s4 1983009808
    %v942 = vunpack.c.0.s8 %v941
    %v943 = vlaneseq
    %v944 = vshrl.u32 %v943, 7
    %v945 = vsub.s32 %v942, %v944
    %v946 = vrot.slane %v932, %v945
    %v947 = vcombine.low %v939, %v946
    %v948 = vsel %vm256, %v930, 0
    %v950 = vsel %vm256, %v947, 0
    %952 = vmatprep.subr.mxu0 0.0
    %953 = vmatpush1.msra.mxu0 0.0
    %954 = vmatprep.subr.mxu0 0.0
    %955 = vmatpush1.msra.mxu0 0.0
    %956 = vmatprep.subr.mxu0 0.0
    %957 = vmatpush1.msra.mxu0 0.0
    %958 = vmatprep.subr.mxu0 0.0
    %959 = vmatpush1.msra.mxu0 0.0
    %960 = vmatprep.subr.mxu0 0.0
    %961 = vmatpush1.msra.mxu0 0.0
    %962 = vmatprep.subr.mxu0 0.0
    %963 = vmatpush1.msra.mxu0 0.0
    %964 = vmatprep.subr.mxu0 0.0
    %965 = vmatpush1.msra.mxu0 0.0
    %966 = vmatprep.subr.mxu0 0.0
    %967 = vmatpush1.msra.mxu0 0.0
    %968 = vmatprep.subr.mxu0 0.0
    %969 = vmatpush1.msra.mxu0 0.0
    %970 = vmatprep.subr.mxu0 0.0
    %971 = vmatpush1.msra.mxu0 0.0
    %972 = vmatprep.subr.mxu0 0.0
    %973 = vmatpush1.msra.mxu0 0.0
    %974 = vmatprep.subr.mxu0 0.0
    %975 = vmatpush1.msra.mxu0 0.0
    %976 = vmatprep.subr.mxu0 0.0
    %977 = vmatpush1.msra.mxu0 %v898
    %978 = vmatprep.subr.mxu0 0.0
    %979 = vmatpush1.msra.mxu0 %v897
    %980 = vmatprep.subr.mxu0 0.0
    %981 = vmatpush1.msra.mxu0 %v896
    %982 = vmatprep.subr.mxu0 0.0
    %983 = vmatpush1.msra.mxu0 %v895
    %984 = vmatprep.subr.mxu0 0.0
    %985 = vmatpush2.msra.mxu0 0.0
    %986 = vmatprep.subr.mxu0 0.0
    %987 = vmatpush2.msra.mxu0 0.0
    %988 = vmatprep.subr.mxu0 0.0
    %989 = vmatpush2.msra.mxu0 0.0
    %990 = vmatprep.subr.mxu0 0.0
    %991 = vmatpush2.msra.mxu0 0.0
    %992 = vmatprep.subr.mxu0 0.0
    %993 = vmatpush2.msra.mxu0 0.0
    %994 = vmatprep.subr.mxu0 0.0
    %995 = vmatpush2.msra.mxu0 0.0
    %996 = vmatprep.subr.mxu0 0.0
    %997 = vmatpush2.msra.mxu0 0.0
    %998 = vmatprep.subr.mxu0 0.0
    %999 = vmatpush2.msra.mxu0 0.0
    %1000 = vmatprep.subr.mxu0 0.0
    %1001 = vmatpush2.msra.mxu0 0.0
    %1002 = vmatprep.subr.mxu0 0.0
    %1003 = vmatpush2.msra.mxu0 0.0
    %1004 = vmatprep.subr.mxu0 0.0
    %1005 = vmatpush2.msra.mxu0 0.0
    %1006 = vmatprep.subr.mxu0 0.0
    %1007 = vmatpush2.msra.mxu0 0.0
    %1008 = vmatprep.subr.mxu0 0.0
    %1009 = vmatpush2.msra.mxu0 0.0
    %1010 = vmatprep.subr.mxu0 0.0
    %1011 = vmatpush2.msra.mxu0 0.0
    %1012 = vmatprep.subr.mxu0 0.0
    %1013 = vmatpush2.msra.mxu0 0.0
    %1014 = vmatprep.subr.mxu0 0.0
    %1015 = vmatpush2.msra.mxu0 0.0
    %1016 = vmatprep.mubr.f32.mxu0 0.0
    %1017 = vmatmul.mubr.f32.gmra.mxu0 %v948
    %v1018 = vpop.f32.mrf.mxu0
    %v1019 = vadd.f32 %v904, %v1018
    %v1020 = vpop.f32.mrf.mxu0
    %1021 = vmatprep.mubr.f32.mxu0 0.0
    %1022 = vmatmul.mubr.f32.gmra.mxu0 %v950
    %v1023 = vpop.f32.mrf.mxu0
    %v1024 = vadd.f32 %v904, %v1023
    %v1025 = vpop.f32.mrf.mxu0
    %1026 = vdwg.mxu0
    %v1029 = vcombine.high %v1019, %v1019
    %v1031 = vunpack.c.l.s4 1983009808
    %v1032 = vunpack.c.0.s8 %v1031
    %v1033 = vlaneseq
    %v1034 = vshrl.u32 %v1033, 7
    %v1035 = vsub.s32 %v1032, %v1034
    %v1036 = vrot.slane %v1019, %v1035
    %v1038 = vunpack.c.l.s4 1983009808
    %v1039 = vunpack.c.0.s8 %v1038
    %v1040 = vlaneseq
    %v1041 = vshrl.u32 %v1040, 7
    %v1042 = vsub.s32 %v1039, %v1041
    %v1043 = vrot.slane %v1029, %v1042
    %v1044 = vcombine.high %v1036, %v1036
    %v1045 = vcombine.high %v1043, %v1043
    %v1046 = vcombine.high %v1024, %v1024
    %v1048 = vunpack.c.l.s4 1983009808
    %v1049 = vunpack.c.0.s8 %v1048
    %v1050 = vlaneseq
    %v1051 = vshrl.u32 %v1050, 7
    %v1052 = vsub.s32 %v1049, %v1051
    %v1053 = vrot.slane %v1024, %v1052
    %v1055 = vunpack.c.l.s4 1983009808
    %v1056 = vunpack.c.0.s8 %v1055
    %v1057 = vlaneseq
    %v1058 = vshrl.u32 %v1057, 7
    %v1059 = vsub.s32 %v1056, %v1058
    %v1060 = vrot.slane %v1046, %v1059
    %v1061 = vcombine.high %v1053, %v1053
    %v1062 = vcombine.high %v1060, %v1060
    %vm1071 = vcmask 58368
    %1072 = vst.msk [vmem:[#allocation9] sm:$0x3] %vm1071, %v1036
    %1073 = vst.msk [vmem:[#allocation9 + $0x2] sm:$0x3] %vm1071, %v1044
    %1074 = vst.msk [vmem:[#allocation9 + $0x4] sm:$0x3] %vm1071, %v1043
    %1075 = vst.msk [vmem:[#allocation9 + $0x6] sm:$0x3] %vm1071, %v1045
    %1076 = vst.msk [vmem:[#allocation9 + $0x8] sm:$0x3] %vm1071, %v1053
    %1077 = vst.msk [vmem:[#allocation9 + $0xa] sm:$0x3] %vm1071, %v1061
    %1078 = vst.msk [vmem:[#allocation9 + $0xc] sm:$0x3] %vm1071, %v1060
    %1079 = vst.msk [vmem:[#allocation9 + $0xe] sm:$0x3] %vm1071, %v1062
    // Predicated region
    $region38: #{tpu_custom_call.1} parent=1 // pred_check
      _
    $region39: #{tpu_custom_call.1} parent=1 // pred_check_branch
      %1081 = sbr.rel (0) target = $region41
    $region40: #{tpu_custom_call.1} parent=1 // pred_region
      %s1083 = ssub.s32 256, 256
      %1084 = vsyncadd [#allocation6], %s1083
      %s1085 = sshll.u32 [#allocation9], 4
      %s1086 = int_to_ptr.vmem [resolvable:$true] %s1085
      %1091 = dma.vmem_to_hbm [thread:$0]  %s1086, 256, %s7, [#allocation6], 32, 32, 2
    $region41: #{tpu_custom_call.1} parent=1 // pred_fallthru
      _
    // Predicated region
    $region42: #{tpu_custom_call.1} parent=1 // pred_check
      _
    $region43: #{tpu_custom_call.1} parent=1 // pred_check_branch
      %1093 = sbr.rel (0) target = $region45
    $region44: #{tpu_custom_call.1} parent=1 // pred_region
      %s1095 = ssub.s32 32, 32
      %1096 = vsyncadd [#allocation11], %s1095
      %s1098 = sshll.u32 [#allocation10], 4
      %s1099 = int_to_ptr.vmem [resolvable:$true] %s1098
      %1101 = dma.vmem_to_hbm [thread:$0]  %s1099, 32, %s8, [#allocation11]
    $region45: #{tpu_custom_call.1} parent=1 // pred_fallthru
      _
    // Predicated region
    $region46: #{tpu_custom_call.1} parent=1 // pred_check
      _
    $region47: #{tpu_custom_call.1} parent=1 // pred_check_branch
      %1103 = sbr.rel (0) target = $region49
    $region48: #{tpu_custom_call.1} parent=1 // pred_region
      %1104 = dma.done [#allocation6], 256
    $region49: #{tpu_custom_call.1} parent=1 // pred_fallthru
      _
    // Predicated region
    $region50: #{tpu_custom_call.1} parent=1 // pred_check
      _
    $region51: #{tpu_custom_call.1} parent=1 // pred_check_branch
      %1106 = sbr.rel (0) target = $region53
    $region52: #{tpu_custom_call.1} parent=1 // pred_region
      %1107 = dma.done [#allocation11], 32
    $region53: #{tpu_custom_call.1} parent=1 // pred_fallthru
      _
    %1108 = vsyncpa [#allocation5], 1
    %1109 = vsyncpa [#allocation8], 1
    %1110 = vsyncpa [#allocation6], 1
    %1111 = vsyncpa [#allocation11], 1

</llo_original>
